<compile_context>
chip_gen: v5e
topology: v5e:2x2
jax: 0.10.0
libtpu: 0.0.40
codegen_flags: <defaults>
</compile_context>

<pallas_src>
import functools
import math

import jax
import jax.numpy as jnp
from jax import lax
from jax.experimental import pallas as pl
from jax.experimental.pallas import tpu as pltpu

_INV_SQRT2 = 1.0 / math.sqrt(2.0)


def _round_up(x, m):
    return (x + m - 1) // m * m


def _const_block_spec(shape):
    """Constant-index (resident) block: single-buffered when the build supports it."""
    index_map = lambda i: (0, 0)
    try:
        return pl.BlockSpec(shape, index_map, pipeline_mode=pl.Buffered(1))
    except Exception:  # older builds without pipeline_mode / Buffered
        return pl.BlockSpec(shape, index_map)


def _pick_ff_tile(ff, max_tile):
    """Largest 128-multiple <= max_tile that divides ff; else the whole ff (single chunk)."""
    if ff <= max_tile:
        return ff
    t = (max_tile // 128) * 128
    while t >= 128:
        if ff % t == 0:
            return t
        t -= 128
    return ff


def _ffn_kernel(x_ref, w1_ref, b1_ref, w2_ref, b2_ref, o_ref, *, tile_ff, n_ff_chunks):
    # x_ref: (tm, hidden); w1_ref: (hidden, ff); b1_ref: (1, ff)
    # w2_ref: (ff, hidden); b2_ref: (1, hidden); o_ref: (tm, hidden)
    x = x_ref[...]
    tm = x.shape[0]
    hidden_out = o_ref.shape[1]

    def chunk_contrib(off):
        w1c = w1_ref[:, pl.ds(off, tile_ff)]
        b1c = b1_ref[:, pl.ds(off, tile_ff)]
        # intermediate_dense: native-dtype operands on the MXU, f32 accumulation.
        h = jnp.dot(x, w1c, preferred_element_type=jnp.float32)
        h = h + b1c.astype(jnp.float32)
        # Exact erf-based GELU (torch.nn.GELU default), f32.
        h = 0.5 * h * (1.0 + lax.erf(h * _INV_SQRT2))
        # output_dense contribution of this ff chunk; cast activation to weight dtype so
        # bf16 weights get bf16 MXU throughput, accumulate in f32.
        w2c = w2_ref[pl.ds(off, tile_ff), :]
        return jnp.dot(h.astype(w2c.dtype), w2c, preferred_element_type=jnp.float32)

    if n_ff_chunks == 1:
        acc = chunk_contrib(0)
    else:
        def body(c, acc):
            off = pl.multiple_of(c * tile_ff, tile_ff)
            return acc + chunk_contrib(off)
        acc = lax.fori_loop(0, n_ff_chunks, body,
                            jnp.zeros((tm, hidden_out), jnp.float32),
                            unroll=(n_ff_chunks <= 8))

    o_ref[...] = (acc + b2_ref[...].astype(jnp.float32)).astype(o_ref.dtype)


def bert_feedforward(x, w1, b1, w2, b2, *, tm=512, max_ff_tile=1024, matmul_dtype=None):
    """x: (batch, seq, hidden). w1: (hidden, ff), b1: (ff,), w2: (ff, hidden), b2: (hidden,).

    Weights are stored as (in_dim, out_dim), i.e. the transpose of torch.nn.Linear.weight.
    matmul_dtype (e.g. jnp.bfloat16) optionally casts x/W1/W2 before the kernel for f32
    checkpoints; biases, GELU and accumulation stay in f32 and the output keeps x's dtype.
    """
    batch, seq, hidden = x.shape
    ff = w1.shape[1]
    rows = batch * seq
    out_dtype = x.dtype

    if matmul_dtype is not None:
        x = x.astype(matmul_dtype)
        w1 = w1.astype(matmul_dtype)
        w2 = w2.astype(matmul_dtype)

    # Row padding granule: tiny inputs only pad to the sublane quantum (16 covers bf16
    # packing); larger inputs align to 128/256 for the MXU without a full-tile pad/slice
    # HBM round-trip.
    if rows >= 512:
        granule = 256
    elif rows >= 128:
        granule = 128
    else:
        granule = 16
    padded_rows = _round_up(rows, granule)

    # Row tile: largest granule-multiple <= tm that divides padded_rows.
    tm_eff = max(granule, (min(tm, padded_rows) // granule) * granule)
    while padded_rows % tm_eff != 0:
        tm_eff -= granule
    # Prefer >= 2 grid steps so both v7x TensorCores get work (row axis is "parallel").
    if padded_rows // tm_eff < 2 and padded_rows >= 2 * granule:
        tm_eff = max(granule, ((padded_rows // 2) // granule) * granule)
        while padded_rows % tm_eff != 0:
            tm_eff -= granule

    tile_ff = _pick_ff_tile(ff, max_ff_tile)
    n_ff_chunks = ff // tile_ff

    x2d = x.reshape(rows, hidden)
    if padded_rows != rows:
        x2d = jnp.pad(x2d, ((0, padded_rows - rows), (0, 0)))

    b1_2d = b1.reshape(1, ff)
    b2_2d = b2.reshape(1, hidden)

    xi = x2d.dtype.itemsize
    wi = w1.dtype.itemsize
    oi = jnp.dtype(out_dtype).itemsize

    # VMEM footprint: double-buffered activation tiles, single-buffered resident weights,
    # plus the live f32 intermediates of one ff chunk and the f32 accumulator.
    est = (2 * tm_eff * hidden * xi                       # x tiles
           + 2 * tm_eff * hidden * oi                     # out tiles
           + (hidden * ff + ff * hidden) * wi             # W1 + W2 (Buffered(1))
           + 2 * (ff + hidden) * b1.dtype.itemsize        # biases
           + tm_eff * tile_ff * (4 + wi)                  # f32 h + weight-dtype cast copy
           + tm_eff * hidden * 4)                         # f32 accumulator
    try:
        vmem_cap = int(pltpu.get_tpu_info().vmem_capacity_bytes)
    except Exception:
        vmem_cap = 64 * 1024 * 1024
    # ~15% headroom for compiler-internal scratch: ~54 MiB on v7x, ~109 MiB on v5e/v6e.
    vmem_ceiling = max(32 * 1024 * 1024, int(vmem_cap * 0.85))
    vmem_limit = int(min(max(int(1.5 * est), 32 * 1024 * 1024), vmem_ceiling))

    flops = 4 * rows * hidden * ff                        # two matmuls
    transcendentals = rows * ff                           # one erf per intermediate element
    bytes_accessed = (padded_rows * hidden * xi
                      + (w1.size + w2.size) * wi
                      + (b1.size + b2.size) * b1.dtype.itemsize
                      + padded_rows * hidden * oi)

    kernel = functools.partial(_ffn_kernel, tile_ff=tile_ff, n_ff_chunks=n_ff_chunks)

    out2d = pl.pallas_call(
        kernel,
        out_shape=jax.ShapeDtypeStruct((padded_rows, hidden), out_dtype),
        grid_spec=pltpu.PrefetchScalarGridSpec(
            num_scalar_prefetch=0,
            grid=(padded_rows // tm_eff,),
            in_specs=[
                pl.BlockSpec((tm_eff, hidden), lambda i: (i, 0)),   # x row tile
                _const_block_spec((hidden, ff)),                    # W1 (resident)
                _const_block_spec((1, ff)),                         # b1
                _const_block_spec((ff, hidden)),                    # W2 (resident)
                _const_block_spec((1, hidden)),                     # b2
            ],
            out_specs=pl.BlockSpec((tm_eff, hidden), lambda i: (i, 0)),
        ),
        compiler_params=pltpu.CompilerParams(
            dimension_semantics=("parallel",),
            vmem_limit_bytes=vmem_limit),
        cost_estimate=pl.CostEstimate(
            flops=int(flops),
            transcendentals=int(transcendentals),
            bytes_accessed=int(bytes_accessed)),
    )(x2d, w1, b1_2d, w2, b2_2d)

    if padded_rows != rows:
        out2d = out2d[:rows]
    return out2d.reshape(batch, seq, hidden)


def _ref_ffn(x, w1, b1, w2, b2):
    """Plain-JAX reference (exact GELU), f32 math."""
    hidden = x.shape[-1]
    h = (x.reshape(-1, hidden).astype(jnp.float32) @ w1.astype(jnp.float32)
         + b1.astype(jnp.float32))
    h = 0.5 * h * (1.0 + lax.erf(h * _INV_SQRT2))
    y = h @ w2.astype(jnp.float32) + b2.astype(jnp.float32)
    return y.reshape(x.shape)


if __name__ == "__main__":
    # Small config consistent with the module: hidden_dim=32, feedforward_dim=64.
    batch, seq, hidden, ff = 2, 8, 32, 64

    key = jax.random.PRNGKey(0)
    kx, kw1, kb1, kw2, kb2 = jax.random.split(key, 5)

    x = jax.random.normal(kx, (batch, seq, hidden), dtype=jnp.float32)
    # Deterministic parameter init (weights stored as (in, out), i.e. W.T of torch Linear).
    w1 = jax.random.normal(kw1, (hidden, ff), dtype=jnp.float32) * 0.02
    b1 = jax.random.normal(kb1, (ff,), dtype=jnp.float32) * 0.02
    w2 = jax.random.normal(kw2, (ff, hidden), dtype=jnp.float32) * 0.02
    b2 = jax.random.normal(kb2, (hidden,), dtype=jnp.float32) * 0.02

    # f32 path.
    out = bert_feedforward(x, w1, b1, w2, b2)
    jax.block_until_ready(out)
    ref = _ref_ffn(x, w1, b1, w2, b2)
    assert jnp.allclose(out, ref, atol=1e-5, rtol=1e-5), "f32 mismatch vs reference"

    # bf16 weights/activations path (native bf16 MXU feed); looser tolerance.
    xb = x.astype(jnp.bfloat16)
    w1b = w1.astype(jnp.bfloat16)
    w2b = w2.astype(jnp.bfloat16)
    ref_b = _ref_ffn(xb.astype(jnp.float32), w1b.astype(jnp.float32), b1,
                     w2b.astype(jnp.float32), b2)
    out_b = bert_feedforward(xb, w1b, b1, w2b, b2)
    jax.block_until_ready(out_b)
    assert jnp.allclose(out_b.astype(jnp.float32), ref_b, atol=3e-2, rtol=3e-2), \
        "bf16 mismatch vs reference"

    # f32 checkpoint with optional bf16 MXU feed (matmul_dtype); compares against bf16 ref.
    out_c = bert_feedforward(x, w1, b1, w2, b2, matmul_dtype=jnp.bfloat16)
    jax.block_until_ready(out_c)
    assert out_c.dtype == x.dtype
    assert jnp.allclose(out_c, ref_b, atol=3e-2, rtol=3e-2), \
        "matmul_dtype=bf16 mismatch vs reference"

    print("KERNEL_OK")
</pallas_src>

<mosaic_0001>
module attributes {stable_mosaic.version = 11 : i64} {
  func.func @_ffn_kernel(%arg0: i32, %arg1: memref<16x32xf32, #tpu.memory_space<vmem>>, %arg2: memref<32x64xf32, #tpu.memory_space<vmem>>, %arg3: memref<1x64xf32, #tpu.memory_space<vmem>>, %arg4: memref<64x32xf32, #tpu.memory_space<vmem>>, %arg5: memref<1x32xf32, #tpu.memory_space<vmem>>, %arg6: memref<16x32xf32, #tpu.memory_space<vmem>>) attributes {dimension_semantics = [#tpu.dimension_semantics<parallel>], iteration_bounds = array<i64: 1>, scalar_prefetch = 0 : i64, scratch_operands = 0 : i64, tpu.core_type = #tpu.core_type<tc>, window_params = [{transform_indices = @transform_0, window_bounds = array<i64: 16, 32>}, {pipeline_mode = #tpu.pipeline_mode<synchronous>, transform_indices = @transform_1, window_bounds = array<i64: 32, 64>}, {pipeline_mode = #tpu.pipeline_mode<synchronous>, transform_indices = @transform_2, window_bounds = array<i64: 1, 64>}, {pipeline_mode = #tpu.pipeline_mode<synchronous>, transform_indices = @transform_3, window_bounds = array<i64: 64, 32>}, {pipeline_mode = #tpu.pipeline_mode<synchronous>, transform_indices = @transform_4, window_bounds = array<i64: 1, 32>}, {transform_indices = @transform_5, window_bounds = array<i64: 16, 32>}]} {
    %c0 = arith.constant 0 : index
    %c0_0 = arith.constant 0 : index
    %0 = vector.load %arg1[%c0, %c0_0] : memref<16x32xf32, #tpu.memory_space<vmem>>, vector<16x32xf32>
    %c0_1 = arith.constant 0 : index
    %c0_2 = arith.constant 0 : index
    %1 = vector.load %arg2[%c0_1, %c0_2] : memref<32x64xf32, #tpu.memory_space<vmem>>, vector<32x64xf32>
    %c0_3 = arith.constant 0 : index
    %c0_4 = arith.constant 0 : index
    %2 = vector.load %arg3[%c0_3, %c0_4] : memref<1x64xf32, #tpu.memory_space<vmem>>, vector<1x64xf32>
    %cst = arith.constant dense<0.000000e+00> : vector<16x64xf32>
    %3 = tpu.matmul %0, %1, %cst {dimension_numbers = #tpu.dot_dimension_numbers<[1], [0], [0], [1], [0, 0, 1, 1], [], []>} : vector<16x32xf32>, vector<32x64xf32>, vector<16x64xf32> -> vector<16x64xf32>
    %4 = vector.broadcast %2 : vector<1x64xf32> to vector<16x64xf32>
    %5 = arith.addf %3, %4 : vector<16x64xf32>
    %cst_5 = arith.constant 5.000000e-01 : f32
    %6 = vector.broadcast %cst_5 : f32 to vector<16x64xf32>
    %7 = arith.mulf %6, %5 : vector<16x64xf32>
    %cst_6 = arith.constant 0.707106769 : f32
    %8 = vector.broadcast %cst_6 : f32 to vector<16x64xf32>
    %9 = arith.mulf %5, %8 : vector<16x64xf32>
    %10 = math.erf %9 : vector<16x64xf32>
    %cst_7 = arith.constant 1.000000e+00 : f32
    %11 = vector.broadcast %cst_7 : f32 to vector<16x64xf32>
    %12 = arith.addf %11, %10 : vector<16x64xf32>
    %13 = arith.mulf %7, %12 : vector<16x64xf32>
    %c0_8 = arith.constant 0 : index
    %c0_9 = arith.constant 0 : index
    %14 = vector.load %arg4[%c0_8, %c0_9] : memref<64x32xf32, #tpu.memory_space<vmem>>, vector<64x32xf32>
    %cst_10 = arith.constant dense<0.000000e+00> : vector<16x32xf32>
    %15 = tpu.matmul %13, %14, %cst_10 {dimension_numbers = #tpu.dot_dimension_numbers<[1], [0], [0], [1], [0, 0, 1, 1], [], []>} : vector<16x64xf32>, vector<64x32xf32>, vector<16x32xf32> -> vector<16x32xf32>
    %c0_11 = arith.constant 0 : index
    %c0_12 = arith.constant 0 : index
    %16 = vector.load %arg5[%c0_11, %c0_12] : memref<1x32xf32, #tpu.memory_space<vmem>>, vector<1x32xf32>
    %17 = vector.broadcast %16 : vector<1x32xf32> to vector<16x32xf32>
    %18 = arith.addf %15, %17 : vector<16x32xf32>
    %c0_13 = arith.constant 0 : index
    %c0_14 = arith.constant 0 : index
    %19 = vector.load %arg6[%c0_13, %c0_14] : memref<16x32xf32, #tpu.memory_space<vmem>>, vector<16x32xf32>
    tpu.vector_store %arg6[%c0_13, %c0_14], %18 {strides = array<i32>} : memref<16x32xf32, #tpu.memory_space<vmem>>, vector<16x32xf32>,
    return
  }
  func.func @transform_0(%arg0: i32) -> (i32, i32) {
    %c0_i32 = arith.constant 0 : i32
    %c0_i32_0 = arith.constant 0 : i32
    return %arg0, %c0_i32 : i32, i32
  }
  func.func @transform_1(%arg0: i32) -> (i32, i32) {
    %c0_i32 = arith.constant 0 : i32
    %c0_i32_0 = arith.constant 0 : i32
    %c0_i32_1 = arith.constant 0 : i32
    return %c0_i32, %c0_i32_0 : i32, i32
  }
  func.func @transform_2(%arg0: i32) -> (i32, i32) {
    %c0_i32 = arith.constant 0 : i32
    %c0_i32_0 = arith.constant 0 : i32
    %c0_i32_1 = arith.constant 0 : i32
    return %c0_i32, %c0_i32_0 : i32, i32
  }
  func.func @transform_3(%arg0: i32) -> (i32, i32) {
    %c0_i32 = arith.constant 0 : i32
    %c0_i32_0 = arith.constant 0 : i32
    %c0_i32_1 = arith.constant 0 : i32
    return %c0_i32, %c0_i32_0 : i32, i32
  }
  func.func @transform_4(%arg0: i32) -> (i32, i32) {
    %c0_i32 = arith.constant 0 : i32
    %c0_i32_0 = arith.constant 0 : i32
    %c0_i32_1 = arith.constant 0 : i32
    return %c0_i32, %c0_i32_0 : i32, i32
  }
  func.func @transform_5(%arg0: i32) -> (i32, i32) {
    %c0_i32 = arith.constant 0 : i32
    %c0_i32_0 = arith.constant 0 : i32
    return %arg0, %c0_i32 : i32, i32
  }
}

</mosaic_0001>

<llo_original>
// kernel: tpu_custom_call.1
$region0: #{tpu_custom_call.1}
  #allocation0 [shape = 'u32[]', space=smem, size = 0x4, offset = 0x4, fixed_abs, tag = 'smem constant byte address 0x4 - core index']
  #allocation1 [shape = 'u32[72,128]{1,0:T(1,128)}', space=vmem, size = 0x9000, scoped, tag = 'internal scratch']
  %s0 = inlined_call_operand.vmem [shape: f32[16,32], index: 0, kind: input, shape index: {}]
  %s1 = inlined_call_operand.vmem [shape: f32[32,64], index: 1, kind: input, shape index: {}]
  %s2 = inlined_call_operand.vmem [shape: f32[1,64], index: 2, kind: input, shape index: {}]
  %s3 = inlined_call_operand.vmem [shape: f32[64,32], index: 3, kind: input, shape index: {}]
  %s4 = inlined_call_operand.vmem [shape: f32[1,32], index: 4, kind: input, shape index: {}]
  %s5 = inlined_call_operand.hbm [shape: f32[16,32], index: 5, kind: output, shape index: {}]
  %s6 = sld [smem:[#allocation0]]
  $region30: #{tpu_custom_call.1} parent=0
    _
  %s8 = ssub.s32 1, %s6
  %s9 = scalar_select 0, %s8, %s6
  $region1: #{tpu_custom_call.1} parent=0
    #allocation2 [shape = 'u8[8192]{0}', space=vmem, size = 0x2000, scoped, tag = 'output window, operand 0, single buffered']
    #allocation3 [shape = 's32[1]{0}', space=sflag, size = 0x4, scoped, tag = 'scoped memory for tpu_custom_call.1']
    %10 = vsyncpa [#allocation3], 0
    // Predicated region
    $region2: #{tpu_custom_call.1} parent=1 // pred_check
      _
    $region3: #{tpu_custom_call.1} parent=1 // pred_check_branch
      %12 = sbr.rel (0) target = $region5
    $region4: #{tpu_custom_call.1} parent=1 // pred_region
      _
    $region5: #{tpu_custom_call.1} parent=1 // pred_fallthru
      _
    // Predicated region
    $region6: #{tpu_custom_call.1} parent=1 // pred_check
      _
    $region7: #{tpu_custom_call.1} parent=1 // pred_check_branch
      %14 = sbr.rel (0) target = $region9
    $region8: #{tpu_custom_call.1} parent=1 // pred_region
      _
    $region9: #{tpu_custom_call.1} parent=1 // pred_fallthru
      _
    // Predicated region
    $region10: #{tpu_custom_call.1} parent=1 // pred_check
      _
    $region11: #{tpu_custom_call.1} parent=1 // pred_check_branch
      %16 = sbr.rel (0) target = $region13
    $region12: #{tpu_custom_call.1} parent=1 // pred_region
      _
    $region13: #{tpu_custom_call.1} parent=1 // pred_fallthru
      _
    // Predicated region
    $region14: #{tpu_custom_call.1} parent=1 // pred_check
      _
    $region15: #{tpu_custom_call.1} parent=1 // pred_check_branch
      %18 = sbr.rel (0) target = $region17
    $region16: #{tpu_custom_call.1} parent=1 // pred_region
      _
    $region17: #{tpu_custom_call.1} parent=1 // pred_fallthru
      _
    // Predicated region
    $region18: #{tpu_custom_call.1} parent=1 // pred_check
      _
    $region19: #{tpu_custom_call.1} parent=1 // pred_check_branch
      %20 = sbr.rel (0) target = $region21
    $region20: #{tpu_custom_call.1} parent=1 // pred_region
      _
    $region21: #{tpu_custom_call.1} parent=1 // pred_fallthru
      _
    %v21 = vld [vmem:[%s0] sm:$0xff]
    %v22 = vld [vmem:[%s0 + $0x8] sm:$0xff]
    %v23 = vld [vmem:[%s1] sm:$0xff]
    %v24 = vld [vmem:[%s1 + $0x8] sm:$0xff]
    %v25 = vld [vmem:[%s1 + $0x10] sm:$0xff]
    %v26 = vld [vmem:[%s1 + $0x18] sm:$0xff]
    %v27 = vld [vmem:[%s2] sm:$0x1]
    %v29 = vperm.slane %v27, 0
    %vm31 = vcmask 261120
    %v33 = vsel %vm31, %v21, 0
    %v36 = vsel %vm31, %v22, 0
    %38 = vmatpush.msra.mxu0 0.0
    %39 = vmatpush.msra.mxu0 0.0
    %40 = vmatpush.msra.mxu0 0.0
    %41 = vmatpush.msra.mxu0 0.0
    %42 = vmatpush.msra.mxu0 0.0
    %43 = vmatpush.msra.mxu0 0.0
    %44 = vmatpush.msra.mxu0 0.0
    %45 = vmatpush.msra.mxu0 0.0
    %46 = vmatpush.msra.mxu0 0.0
    %47 = vmatpush.msra.mxu0 0.0
    %48 = vmatpush.msra.mxu0 0.0
    %49 = vmatpush.msra.mxu0 0.0
    %50 = vmatpush.msra.mxu0 %v26
    %51 = vmatpush.msra.mxu0 %v25
    %52 = vmatpush.msra.mxu0 %v24
    %53 = vmatpush.msra.mxu0 %v23
    %54 = vmatmul.f32.gmra.mxu0 %v33
    %v55 = vpop.f32.mrf.mxu0
    %v56 = vadd.f32 %v29, %v55
    %57 = vmatmul.f32.gmra.mxu0 %v36
    %v58 = vpop.f32.mrf.mxu0
    %v59 = vadd.f32 %v29, %v58
    %60 = vdwg.mxu0
    %v61 = vmul.f32 %v56, 0.5
    %v62 = vmul.f32 %v59, 0.5
    %v63 = vmul.f32 %v56, 0.70710677
    %v64 = vmul.f32 %v59, 0.70710677
    %v65 = vmul.f32 %v63, %v63
    %v66 = vmin.f32 16.0, %v65
    %v67 = vmul.f32 %v66, 2.1237322e-06
    %v68 = vadd.f32 %v67, 0.00028619796
    %v69 = vmul.f32 %v66, %v68
    %v70 = vadd.f32 %v69, 0.0036580483
    %v71 = vmul.f32 %v66, %v70
    %v72 = vadd.f32 %v71, 0.05243302
    %v73 = vmul.f32 %v66, %v72
    %v74 = vadd.f32 %v73, 0.18741608
    %v75 = vmul.f32 %v66, %v74
    %v76 = vadd.f32 %v75, 1.1283791
    %v77 = vmul.f32 %v63, %v76
    %v78 = vmul.f32 %v66, 3.8918573e-05
    %v79 = vadd.f32 %v78, 0.001143296
    %v80 = vmul.f32 %v66, %v79
    %v81 = vadd.f32 %v80, 0.014752088
    %v82 = vmul.f32 %v66, %v81
    %v83 = vadd.f32 %v82, 0.112945676
    %v84 = vmul.f32 %v66, %v83
    %v85 = vadd.f32 %v84, 0.4994258
    %v86 = vmul.f32 %v66, %v85
    %v87 = vadd.f32 %v86, 1.0
    %v88 = vrcp.pop %v87
    %v89 = vmul.f32 %v87, %v88
    %v90 = vsub.f32 1.0, %v89
    %v91 = vmul.f32 %v88, %v90
    %v92 = vadd.f32 %v88, %v91
    %vm93 = vweird.f32 %v87
    %vm94 = vweird.f32 %v88
    %vm95 = vmor %vm93, %vm94
    %v96 = vsel %vm95, %v88, %v92
    %v97 = vand.u32 2147483647, %v87
    %vm98 = vcmp.eq.f32.partialorder %v97, 8.507059e+37
    %v99 = vand.u32 %v87, 2147483648
    %v100 = vor.u32 1.1754944e-38, %v99
    %v101 = vsel %vm98, %v100, %v96
    %v102 = vmul.f32 %v77, %v101
    %v103 = vmin.f32 %v102, 1.0
    %v104 = vmax.f32 %v103, -1.0
    %v105 = vmul.f32 %v64, %v64
    %v106 = vmin.f32 16.0, %v105
    %v107 = vmul.f32 %v106, 2.1237322e-06
    %v108 = vadd.f32 %v107, 0.00028619796
    %v109 = vmul.f32 %v106, %v108
    %v110 = vadd.f32 %v109, 0.0036580483
    %v111 = vmul.f32 %v106, %v110
    %v112 = vadd.f32 %v111, 0.05243302
    %v113 = vmul.f32 %v106, %v112
    %v114 = vadd.f32 %v113, 0.18741608
    %v115 = vmul.f32 %v106, %v114
    %v116 = vadd.f32 %v115, 1.1283791
    %v117 = vmul.f32 %v64, %v116
    %v118 = vmul.f32 %v106, 3.8918573e-05
    %v119 = vadd.f32 %v118, 0.001143296
    %v120 = vmul.f32 %v106, %v119
    %v121 = vadd.f32 %v120, 0.014752088
    %v122 = vmul.f32 %v106, %v121
    %v123 = vadd.f32 %v122, 0.112945676
    %v124 = vmul.f32 %v106, %v123
    %v125 = vadd.f32 %v124, 0.4994258
    %v126 = vmul.f32 %v106, %v125
    %v127 = vadd.f32 %v126, 1.0
    %v128 = vrcp.pop %v127
    %v129 = vmul.f32 %v127, %v128
    %v130 = vsub.f32 1.0, %v129
    %v131 = vmul.f32 %v128, %v130
    %v132 = vadd.f32 %v128, %v131
    %vm133 = vweird.f32 %v127
    %vm134 = vweird.f32 %v128
    %vm135 = vmor %vm133, %vm134
    %v136 = vsel %vm135, %v128, %v132
    %v137 = vand.u32 2147483647, %v127
    %vm138 = vcmp.eq.f32.partialorder %v137, 8.507059e+37
    %v139 = vand.u32 %v127, 2147483648
    %v140 = vor.u32 1.1754944e-38, %v139
    %v141 = vsel %vm138, %v140, %v136
    %v142 = vmul.f32 %v117, %v141
    %v143 = vmin.f32 %v142, 1.0
    %v144 = vmax.f32 %v143, -1.0
    %v145 = vadd.f32 %v104, 1.0
    %v146 = vadd.f32 %v144, 1.0
    %v147 = vmul.f32 %v61, %v145
    %v148 = vmul.f32 %v62, %v146
    %v149 = vld [vmem:[%s3] sm:$0xff]
    %v150 = vld [vmem:[%s3 + $0x8] sm:$0xff]
    %v151 = vld [vmem:[%s3 + $0x10] sm:$0xff]
    %v152 = vld [vmem:[%s3 + $0x18] sm:$0xff]
    %v153 = vld [vmem:[%s3 + $0x20] sm:$0xff]
    %v154 = vld [vmem:[%s3 + $0x28] sm:$0xff]
    %v155 = vld [vmem:[%s3 + $0x30] sm:$0xff]
    %v156 = vld [vmem:[%s3 + $0x38] sm:$0xff]
    %v157 = vld [vmem:[%s4] sm:$0x1]
    %v159 = vperm.slane %v157, 0
    %vm161 = vcmask 523264
    %v163 = vsel %vm161, %v147, 0
    %v166 = vsel %vm161, %v148, 0
    %168 = vmatpush.msra.mxu0 0.0
    %169 = vmatpush.msra.mxu0 0.0
    %170 = vmatpush.msra.mxu0 0.0
    %171 = vmatpush.msra.mxu0 0.0
    %172 = vmatpush.msra.mxu0 0.0
    %173 = vmatpush.msra.mxu0 0.0
    %174 = vmatpush.msra.mxu0 0.0
    %175 = vmatpush.msra.mxu0 0.0
    %176 = vmatpush.msra.mxu0 %v156
    %177 = vmatpush.msra.mxu0 %v155
    %178 = vmatpush.msra.mxu0 %v154
    %179 = vmatpush.msra.mxu0 %v153
    %180 = vmatpush.msra.mxu0 %v152
    %181 = vmatpush.msra.mxu0 %v151
    %182 = vmatpush.msra.mxu0 %v150
    %183 = vmatpush.msra.mxu0 %v149
    %184 = vmatmul.f32.gmra.mxu0 %v163
    %v185 = vpop.f32.mrf.mxu0
    %v186 = vadd.f32 %v159, %v185
    %187 = vmatmul.f32.gmra.mxu0 %v166
    %v188 = vpop.f32.mrf.mxu0
    %v189 = vadd.f32 %v159, %v188
    %190 = vdwg.mxu0
    %191 = vst.msk [vmem:[#allocation2] sm:$0xff] %vm31, %v186
    %192 = vst.msk [vmem:[#allocation2 + $0x8] sm:$0xff] %vm31, %v189
    // Predicated region
    $region22: #{tpu_custom_call.1} parent=1 // pred_check
      _
    $region23: #{tpu_custom_call.1} parent=1 // pred_check_branch
      %194 = sbr.rel (0) target = $region25
    $region24: #{tpu_custom_call.1} parent=1 // pred_region
      %196 = vsyncadd [#allocation3], 0
      %s197 = sshll.u32 [#allocation2], 4
      %s198 = int_to_ptr.vmem [resolvable:$true] %s197
      %s199 = sshll.u32 %s5, 4
      %s200 = int_to_ptr.hbm [resolvable:$true] %s199
      %205 = dma.vmem_to_hbm [thread:$0]  %s198, 256, %s200, [#allocation3], 128, 128, 8
    $region25: #{tpu_custom_call.1} parent=1 // pred_fallthru
      _
    // Predicated region
    $region26: #{tpu_custom_call.1} parent=1 // pred_check
      _
    $region27: #{tpu_custom_call.1} parent=1 // pred_check_branch
      %207 = sbr.rel (0) target = $region29
    $region28: #{tpu_custom_call.1} parent=1 // pred_region
      %209 = dma.done [#allocation3], 256
    $region29: #{tpu_custom_call.1} parent=1 // pred_fallthru
      _
    %210 = vsyncpa [#allocation3], 1

</llo_original>
